<compile_context>
chip_gen: v5e
topology: v5e:2x2
jax: 0.10.0
libtpu: 0.0.40
codegen_flags: <defaults>
</compile_context>

<pallas_src>
import functools

import jax
import jax.numpy as jnp
from jax.experimental import pallas as pl
from jax.experimental.pallas import tpu as pltpu

SMOOTH = 1e-6
BCE_WEIGHT = 0.5
_LOG_CLAMP = -100.0  # PyTorch BCELoss clamps each log term at -100.


def _round_up(x, m):
    return ((x + m - 1) // m) * m


def _bce_dice_kernel(pred_ref, targ_ref, out_ref, *,
                     n_lane_per_core, tile_l, true_l, hard_targets, needs_mask):
    li = pl.program_id(2)

    # Packed per-row partials [bce, intersection, union] are VMEM-resident
    # across the lane ("arbitrary") axis; zero them on its first step.
    @pl.when(li == 0)
    def _():
        out_ref[...] = jnp.zeros_like(out_ref)

    p = pred_ref[...].astype(jnp.float32)   # (TILE_B, TILE_L)
    t = targ_ref[...].astype(jnp.float32)

    if needs_mask:
        # Ragged lane tail (and/or core-split overrun): zero out-of-range lanes
        # so garbage never reaches log()/the accumulators.  Zeros contribute
        # exactly 0 to BCE (via the -100 clamp) and to the dice sums.
        c = pl.program_id(0)
        lane_tile = c * n_lane_per_core + li
        col = lane_tile * tile_l + jax.lax.broadcasted_iota(jnp.int32, p.shape, 1)
        valid = col < true_l
        p = jnp.where(valid, p, 0.0)
        t = jnp.where(valid, t, 0.0)

    if hard_targets:
        # Binary-mask fast path: one log + one select per element.
        bce_elem = -jnp.maximum(jnp.log(jnp.where(t > 0.5, p, 1.0 - p)), _LOG_CLAMP)
    else:
        # General (soft-target) nn.BCELoss with PyTorch's -100 log clamp.
        log_p = jnp.maximum(jnp.log(p), _LOG_CLAMP)
        log_1mp = jnp.maximum(jnp.log1p(-p), _LOG_CLAMP)
        bce_elem = -(t * log_p + (1.0 - t) * log_1mp)

    # Per-row (lane-axis) partial sums packed into one (TILE_B, 3) accumulate.
    partial = jnp.concatenate(
        [jnp.sum(bce_elem, axis=-1, keepdims=True),
         jnp.sum(p * t, axis=-1, keepdims=True),
         jnp.sum(p + t, axis=-1, keepdims=True)],
        axis=-1)
    out_ref[...] += partial[None]


def bce_dice_loss(pred, target, *, hard_targets=False, block_bytes_per_input=1 << 20):
    """0.5 * BCE + 0.5 * DiceLoss for pred/target of shape (B, 1, H, W).

    `hard_targets=True` enables a cheaper single-log BCE path that is exact
    only for binary {0,1} targets (default off to keep soft-target semantics).
    """
    B, C, H, W = pred.shape
    assert C == 1 and target.shape == pred.shape
    L = H * W

    pred2d = pred.reshape(B, L)      # free view; keep caller dtypes (no pre-cast)
    targ2d = target.reshape(B, L)

    # Dtype-aware batch tile: 8 rows for f32, 16 for bf16, 32 for int8/fp8.
    min_item = min(pred2d.dtype.itemsize, targ2d.dtype.itemsize)
    tile_b_native = 8 * max(1, 4 // min_item)
    TILE_B = B if B < tile_b_native else tile_b_native

    # Lane tile from a ~1 MiB-per-input VMEM budget: lane-dense multiple of 128,
    # or the full L (a full-dim block is legal even if not a multiple of 128).
    max_item = max(pred2d.dtype.itemsize, targ2d.dtype.itemsize)
    budget_l = max(128, (block_bytes_per_input // (TILE_B * max_item)) // 128 * 128)
    TILE_L = L if L <= budget_l else budget_l

    n_b = pl.cdiv(B, TILE_B)
    n_l = pl.cdiv(L, TILE_L)

    # v7x: guarantee a parallel axis of extent >= 2 for the two TensorCores.
    if n_b == 1 and n_l == 1 and L >= 2048:
        TILE_L = _round_up(pl.cdiv(L, 2), 128)
        n_l = pl.cdiv(L, TILE_L)
    NCORES = 2 if (n_b == 1 and n_l >= 2) else 1
    n_lpc = pl.cdiv(n_l, NCORES)

    needs_mask = (NCORES * n_lpc * TILE_L) != L

    if NCORES * n_lpc == n_l:
        in_map = lambda c, bi, li: (bi, c * n_lpc + li)
    else:
        # Last core's final step would run past the lane-tile range; clamp to
        # the final tile (its data is fully masked off in-kernel).
        last_tile = n_l - 1
        in_map = lambda c, bi, li: (bi, jnp.minimum(c * n_lpc + li, last_tile))

    kernel = functools.partial(
        _bce_dice_kernel,
        n_lane_per_core=n_lpc, tile_l=TILE_L, true_l=L,
        hard_targets=hard_targets, needs_mask=needs_mask)

    block_in_bytes = TILE_B * TILE_L * (pred2d.dtype.itemsize + targ2d.dtype.itemsize)
    vmem_limit = int(min(32 << 20, max(16 << 20, 6 * block_in_bytes + (4 << 20))))

    sums = pl.pallas_call(
        kernel,
        out_shape=jax.ShapeDtypeStruct((NCORES, B, 3), jnp.float32),
        grid=(NCORES, n_b, n_lpc),
        in_specs=[
            pl.BlockSpec((TILE_B, TILE_L), in_map),
            pl.BlockSpec((TILE_B, TILE_L), in_map),
        ],
        out_specs=pl.BlockSpec((1, TILE_B, 3), lambda c, bi, li: (c, bi, 0)),
        compiler_params=pltpu.CompilerParams(
            dimension_semantics=("parallel", "parallel", "arbitrary"),
            vmem_limit_bytes=vmem_limit,
        ),
    )(pred2d, targ2d)

    # Tiny finalize in plain JAX; reciprocals are Python float constants.
    sums = jnp.sum(sums, axis=0)                 # (B, 3): [bce, intersection, union]
    inv_n = 1.0 / float(B * H * W)
    inv_b = 1.0 / float(B)
    bce = jnp.sum(sums[:, 0]) * inv_n
    dice_coef = (2.0 * sums[:, 1] + SMOOTH) / (sums[:, 2] + SMOOTH)
    dice = 1.0 - jnp.sum(dice_coef) * inv_b
    return BCE_WEIGHT * bce + (1.0 - BCE_WEIGHT) * dice


def _reference(pred, target):
    p = pred.reshape(pred.shape[0], -1).astype(jnp.float32)
    t = target.reshape(target.shape[0], -1).astype(jnp.float32)
    bce = jnp.mean(-(t * jnp.log(p) + (1.0 - t) * jnp.log1p(-p)))
    inter = jnp.sum(p * t, axis=1)
    union = jnp.sum(p, axis=1) + jnp.sum(t, axis=1)
    dice = 1.0 - jnp.mean((2.0 * inter + SMOOTH) / (union + SMOOTH))
    return BCE_WEIGHT * bce + (1.0 - BCE_WEIGHT) * dice


if __name__ == "__main__":
    key = jax.random.PRNGKey(0)
    k1, k2 = jax.random.split(key)

    # pred: sigmoid-like probabilities in (0, 1); target: binary mask in bf16
    # (exactly representable, halves target HBM traffic).
    B, C, H, W = 2, 1, 16, 16
    pred = jax.nn.sigmoid(jax.random.normal(k1, (B, C, H, W), dtype=jnp.float32))
    target = (jax.random.uniform(k2, (B, C, H, W)) > 0.5).astype(jnp.bfloat16)

    loss = bce_dice_loss(pred, target)
    jax.block_until_ready(loss)
    ref = _reference(pred, target)
    assert jnp.allclose(loss, ref, atol=1e-5, rtol=1e-5), (loss, ref)

    # Opt-in hard-target (single-log) path — exact for binary masks.
    loss_hard = bce_dice_loss(pred, target, hard_targets=True)
    jax.block_until_ready(loss_hard)
    assert jnp.allclose(loss_hard, ref, atol=1e-5, rtol=1e-5), (loss_hard, ref)

    # Ragged shape exercising the in-kernel lane-tail mask and the 2-way
    # per-core lane split (no wrapper padding anywhere).
    B2, H2, W2 = 3, 48, 50
    k3, k4 = jax.random.split(k2)
    pred2 = jax.nn.sigmoid(jax.random.normal(k3, (B2, 1, H2, W2), dtype=jnp.float32))
    target2 = (jax.random.uniform(k4, (B2, 1, H2, W2)) > 0.5).astype(jnp.bfloat16)
    loss2 = bce_dice_loss(pred2, target2)
    jax.block_until_ready(loss2)
    ref2 = _reference(pred2, target2)
    assert jnp.allclose(loss2, ref2, atol=1e-5, rtol=1e-5), (loss2, ref2)

    print("KERNEL_OK")
</pallas_src>

<mosaic_0001>
module attributes {stable_mosaic.version = 11 : i64} {
  func.func @_bce_dice_kernel(%arg0: i32, %arg1: i32, %arg2: i32, %arg3: memref<2x256xf32, #tpu.memory_space<vmem>>, %arg4: memref<2x256xbf16, #tpu.memory_space<vmem>>, %arg5: memref<1x2x3xf32, #tpu.memory_space<vmem>>) attributes {dimension_semantics = [#tpu.dimension_semantics<parallel>, #tpu.dimension_semantics<parallel>, #tpu.dimension_semantics<arbitrary>], iteration_bounds = array<i64: 1, 1, 1>, scalar_prefetch = 0 : i64, scratch_operands = 0 : i64, tpu.core_type = #tpu.core_type<tc>, window_params = [{transform_indices = @transform_0, window_bounds = array<i64: 2, 256>}, {transform_indices = @transform_1, window_bounds = array<i64: 2, 256>}, {transform_indices = @transform_2, window_bounds = array<i64: 1, 2, 3>}]} {
    %c0_i32 = arith.constant 0 : i32
    %0 = arith.cmpi eq, %arg2, %c0_i32 : i32
    %1 = arith.extui %0 : i1 to i32
    %c0_i32_0 = arith.constant 0 : i32
    %2 = arith.cmpi ne, %1, %c0_i32_0 : i32
    scf.if %2 {
      %cst_17 = arith.constant 0.000000e+00 : f32
      %34 = vector.broadcast %cst_17 : f32 to vector<1x2x3xf32>
      %c0_18 = arith.constant 0 : index
      %c0_19 = arith.constant 0 : index
      %c0_20 = arith.constant 0 : index
      %35 = vector.load %arg5[%c0_18, %c0_19, %c0_20] : memref<1x2x3xf32, #tpu.memory_space<vmem>>, vector<1x2x3xf32>
      tpu.vector_store %arg5[%c0_18, %c0_19, %c0_20], %34 {strides = array<i32>} : memref<1x2x3xf32, #tpu.memory_space<vmem>>, vector<1x2x3xf32>,
    } else {
    }
    %c0 = arith.constant 0 : index
    %c0_1 = arith.constant 0 : index
    %3 = vector.load %arg3[%c0, %c0_1] : memref<2x256xf32, #tpu.memory_space<vmem>>, vector<2x256xf32>
    %c0_2 = arith.constant 0 : index
    %c0_3 = arith.constant 0 : index
    %4 = vector.load %arg4[%c0_2, %c0_3] : memref<2x256xbf16, #tpu.memory_space<vmem>>, vector<2x256xbf16>
    %5 = arith.extf %4 : vector<2x256xbf16> to vector<2x256xf32>
    %6 = math.log %3 : vector<2x256xf32>
    %cst = arith.constant -1.000000e+02 : f32
    %7 = vector.broadcast %cst : f32 to vector<2x256xf32>
    %8 = arith.maximumf %6, %7 : vector<2x256xf32>
    %cst_4 = arith.constant 0.000000e+00 : f32
    %9 = vector.broadcast %cst_4 : f32 to vector<2x256xf32>
    %10 = arith.subf %9, %3 : vector<2x256xf32>
    %11 = math.log1p %10 : vector<2x256xf32>
    %cst_5 = arith.constant -1.000000e+02 : f32
    %12 = vector.broadcast %cst_5 : f32 to vector<2x256xf32>
    %13 = arith.maximumf %11, %12 : vector<2x256xf32>
    %14 = arith.mulf %5, %8 : vector<2x256xf32>
    %cst_6 = arith.constant 1.000000e+00 : f32
    %15 = vector.broadcast %cst_6 : f32 to vector<2x256xf32>
    %16 = arith.subf %15, %5 : vector<2x256xf32>
    %17 = arith.mulf %16, %13 : vector<2x256xf32>
    %18 = arith.addf %14, %17 : vector<2x256xf32>
    %cst_7 = arith.constant 0.000000e+00 : f32
    %19 = vector.broadcast %cst_7 : f32 to vector<2x256xf32>
    %20 = arith.subf %19, %18 : vector<2x256xf32>
    %cst_8 = arith.constant dense<0.000000e+00> : vector<2xf32>
    %21 = vector.multi_reduction <add>, %20, %cst_8 [1] : vector<2x256xf32> to vector<2xf32>
    %22 = vector.shape_cast %21 : vector<2xf32> to vector<2x1xf32>
    %23 = arith.mulf %3, %5 : vector<2x256xf32>
    %cst_9 = arith.constant dense<0.000000e+00> : vector<2xf32>
    %24 = vector.multi_reduction <add>, %23, %cst_9 [1] : vector<2x256xf32> to vector<2xf32>
    %25 = vector.shape_cast %24 : vector<2xf32> to vector<2x1xf32>
    %26 = arith.addf %3, %5 : vector<2x256xf32>
    %cst_10 = arith.constant dense<0.000000e+00> : vector<2xf32>
    %27 = vector.multi_reduction <add>, %26, %cst_10 [1] : vector<2x256xf32> to vector<2xf32>
    %28 = vector.shape_cast %27 : vector<2xf32> to vector<2x1xf32>
    %29 = tpu.concatenate %22, %25, %28 in 1 : vector<2x1xf32>, vector<2x1xf32>, vector<2x1xf32> -> vector<2x3xf32>
    %c0_11 = arith.constant 0 : index
    %c0_12 = arith.constant 0 : index
    %c0_13 = arith.constant 0 : index
    %30 = vector.load %arg5[%c0_11, %c0_12, %c0_13] : memref<1x2x3xf32, #tpu.memory_space<vmem>>, vector<1x2x3xf32>
    %31 = vector.shape_cast %29 : vector<2x3xf32> to vector<1x2x3xf32>
    %32 = arith.addf %30, %31 : vector<1x2x3xf32>
    %c0_14 = arith.constant 0 : index
    %c0_15 = arith.constant 0 : index
    %c0_16 = arith.constant 0 : index
    %33 = vector.load %arg5[%c0_14, %c0_15, %c0_16] : memref<1x2x3xf32, #tpu.memory_space<vmem>>, vector<1x2x3xf32>
    tpu.vector_store %arg5[%c0_14, %c0_15, %c0_16], %32 {strides = array<i32>} : memref<1x2x3xf32, #tpu.memory_space<vmem>>, vector<1x2x3xf32>,
    return
  }
  func.func @transform_0(%arg0: i32, %arg1: i32, %arg2: i32) -> (i32, i32) {
    %c1_i32 = arith.constant 1 : i32
    %0 = arith.muli %arg0, %c1_i32 : i32
    %1 = arith.addi %0, %arg2 : i32
    %c0_i32 = arith.constant 0 : i32
    return %arg1, %1 : i32, i32
  }
  func.func @transform_1(%arg0: i32, %arg1: i32, %arg2: i32) -> (i32, i32) {
    %c1_i32 = arith.constant 1 : i32
    %0 = arith.muli %arg0, %c1_i32 : i32
    %1 = arith.addi %0, %arg2 : i32
    %c0_i32 = arith.constant 0 : i32
    return %arg1, %1 : i32, i32
  }
  func.func @transform_2(%arg0: i32, %arg1: i32, %arg2: i32) -> (i32, i32, i32) {
    %c0_i32 = arith.constant 0 : i32
    %c0_i32_0 = arith.constant 0 : i32
    return %arg0, %arg1, %c0_i32 : i32, i32, i32
  }
}

</mosaic_0001>

<llo_original>
// kernel: tpu_custom_call.1
$region0: #{tpu_custom_call.1}
  #allocation0 [shape = 'u32[]', space=smem, size = 0x4, offset = 0x4, fixed_abs, tag = 'smem constant byte address 0x4 - core index']
  #allocation1 [shape = 'u32[72,128]{1,0:T(1,128)}', space=vmem, size = 0x9000, scoped, tag = 'internal scratch']
  %s0 = inlined_call_operand.hbm [shape: f32[2,256], index: 0, kind: input, shape index: {}]
  %s1 = inlined_call_operand.hbm [shape: bf16[2,256], index: 1, kind: input, shape index: {}]
  %s2 = inlined_call_operand.hbm [shape: f32[1,2,3], index: 2, kind: output, shape index: {}]
  %s3 = sld [smem:[#allocation0]]
  $region30: #{tpu_custom_call.1} parent=0
    _
  %s5 = ssub.s32 1, %s3
  %s6 = scalar_select 0, %s5, %s3
  $region1: #{tpu_custom_call.1} parent=0
    #allocation2 [shape = 'u8[2048]{0}', space=vmem, size = 0x800, scoped, tag = 'input window, operand 0, single buffered']
    #allocation3 [shape = 's32[1]{0}', space=sflag, size = 0x4, scoped, tag = 'scoped memory for tpu_custom_call.1']
    #allocation4 [shape = 's32[1]{0}', space=sflag, size = 0x4, scoped, tag = 'scoped memory for tpu_custom_call.1']
    #allocation5 [shape = 'u8[1024]{0}', space=vmem, size = 0x400, scoped, tag = 'input window, operand 1, single buffered']
    #allocation6 [shape = 's32[1]{0}', space=sflag, size = 0x4, scoped, tag = 'scoped memory for tpu_custom_call.1']
    #allocation7 [shape = 'u8[1024]{0}', space=vmem, size = 0x400, scoped, tag = 'output window, operand 0, single buffered']
    %7 = vsyncpa [#allocation3], 0
    %8 = vsyncpa [#allocation6], 0
    %9 = vsyncpa [#allocation4], 0
    // Predicated region
    $region2: #{tpu_custom_call.1} parent=1 // pred_check
      _
    $region3: #{tpu_custom_call.1} parent=1 // pred_check_branch
      %11 = sbr.rel (0) target = $region5
    $region4: #{tpu_custom_call.1} parent=1 // pred_region
      %s12 = sadd.s32 0, 0
      %s13 = smul.u32 2, %s12
      %15 = vsyncadd [#allocation3], 0
      %s16 = smul.addr %s13, 2
      %s17 = scalar_lea.hbm %s0, %s16
      %s19 = sshll.u32 %s17, 4
      %s20 = int_to_ptr.hbm [resolvable:$true] %s19
      %s21 = sshll.u32 [#allocation2], 4
      %s22 = int_to_ptr.vmem [resolvable:$true] %s21
      %24 = dma.hbm_to_vmem [thread:$0]  %s20, 64, %s22, [#allocation3]
    $region5: #{tpu_custom_call.1} parent=1 // pred_fallthru
      _
    // Predicated region
    $region6: #{tpu_custom_call.1} parent=1 // pred_check
      _
    $region7: #{tpu_custom_call.1} parent=1 // pred_check_branch
      %26 = sbr.rel (0) target = $region9
    $region8: #{tpu_custom_call.1} parent=1 // pred_region
      %s27 = sadd.s32 0, 0
      %s28 = smul.u32 2, %s27
      %30 = vsyncadd [#allocation6], 0
      %s31 = scalar_lea.hbm %s1, %s28
      %s33 = sshll.u32 %s31, 4
      %s34 = int_to_ptr.hbm [resolvable:$true] %s33
      %s35 = sshll.u32 [#allocation5], 4
      %s36 = int_to_ptr.vmem [resolvable:$true] %s35
      %38 = dma.hbm_to_vmem [thread:$0]  %s34, 32, %s36, [#allocation6]
    $region9: #{tpu_custom_call.1} parent=1 // pred_fallthru
      _
    // Predicated region
    $region10: #{tpu_custom_call.1} parent=1 // pred_check
      _
    $region11: #{tpu_custom_call.1} parent=1 // pred_check_branch
      %40 = sbr.rel (0) target = $region13
    $region12: #{tpu_custom_call.1} parent=1 // pred_region
      %42 = dma.done [#allocation3], 64
    $region13: #{tpu_custom_call.1} parent=1 // pred_fallthru
      _
    // Predicated region
    $region14: #{tpu_custom_call.1} parent=1 // pred_check
      _
    $region15: #{tpu_custom_call.1} parent=1 // pred_check_branch
      %44 = sbr.rel (0) target = $region17
    $region16: #{tpu_custom_call.1} parent=1 // pred_region
      %46 = dma.done [#allocation6], 32
    $region17: #{tpu_custom_call.1} parent=1 // pred_fallthru
      _
    %s47 = sadd.s32 0, 0
    %s48 = smul.u32 2, %s47
    %s49 = sadd.s32 0, 0
    %s50 = smul.u32 2, %s49
    %p51 = scmp.eq.s32.totalorder 0, 0
    // Predicated region
    $region18: #{tpu_custom_call.1} parent=1 // pred_check
      %p52 = pneg %p51
    $region19: #{tpu_custom_call.1} parent=1 // pred_check_branch
      %54 = sbr.rel (%p52) target = $region21
    $region20: #{tpu_custom_call.1} parent=1 // pred_region
      %vm55 = vcmask 17408
      %56 = vst.msk [vmem:[#allocation7] sm:$0x3] %vm55, 0.0
    $region21: #{tpu_custom_call.1} parent=1 // pred_fallthru
      _
    %v57 = vld [vmem:[#allocation2] sm:$0xf]
    %v58 = vld [vmem:[#allocation5] sm:$0x3]
    %v59 = vunpack.c.l.bf16 %v58
    %v60 = vlog2.pop %v57
    %v61 = vmul.f32 %v60, 0.6931472
    %v62 = vmax.f32 %v61, -100.0
    %v63 = vsub.f32 0.0, %v57
    %v64 = vadd.f32 %v63, 1.0
    %v65 = vlog2.pop %v64
    %v66 = vmul.f32 %v65, 0.6931472
    %v67 = vmul.f32 -0.5, %v63
    %v68 = vadd.f32 %v67, 1.0
    %v69 = vmul.f32 %v68, %v63
    %v70 = vand.u32 2147483647, %v63
    %vm71 = vcmp.lt.f32.partialorder %v70, 0.0004427343
    %v72 = vsel %vm71, %v69, %v66
    %v73 = vmax.f32 %v72, -100.0
    %v74 = vmul.f32 %v59, %v62
    %v75 = vsub.f32 1.0, %v59
    %v76 = vmul.f32 %v75, %v73
    %v77 = vadd.f32 %v74, %v76
    %v78 = vsub.f32 0.0, %v77
    %80 = vst [vmem:[#allocation1] ss:$4 sm:$0xff] %v78
    %v81 = vld.sshfl [vmem:[#allocation1] sm:$0xff pattern:$0x73625140]
    %v82 = vld.sshfl [vmem:[#allocation1 + $0x8] sm:$0xff pattern:$0x73625140]
    %vm85 = vcmask 1041408
    %v86 = vsel %vm85, %v81, 0.0
    %v87 = vsel %vm85, %v82, 0.0
    %v88 = vadd.f32 %v86, %v87
    %89 = vadd.xlane.f32.xlu0 %v88
    %v90 = vpop.xlane.xlu0 %89
    %v91 = vmul.f32 %v57, %v59
    %93 = vst [vmem:[#allocation1] ss:$4 sm:$0xff] %v91
    %v94 = vld.sshfl [vmem:[#allocation1] sm:$0xff pattern:$0x73625140]
    %v95 = vld.sshfl [vmem:[#allocation1 + $0x8] sm:$0xff pattern:$0x73625140]
    %v98 = vsel %vm85, %v94, 0.0
    %v99 = vsel %vm85, %v95, 0.0
    %v100 = vadd.f32 %v98, %v99
    %101 = vadd.xlane.f32.xlu0 %v100
    %v102 = vpop.xlane.xlu0 %101
    %v103 = vadd.f32 %v57, %v59
    %105 = vst [vmem:[#allocation1] ss:$4 sm:$0xff] %v103
    %v106 = vld.sshfl [vmem:[#allocation1] sm:$0xff pattern:$0x73625140]
    %v107 = vld.sshfl [vmem:[#allocation1 + $0x8] sm:$0xff pattern:$0x73625140]
    %v110 = vsel %vm85, %v106, 0.0
    %v111 = vsel %vm85, %v107, 0.0
    %v112 = vadd.f32 %v110, %v111
    %113 = vadd.xlane.f32.xlu0 %v112
    %v114 = vpop.xlane.xlu0 %113
    %vm115 = vcmask 7168
    %v116 = vsel %vm115, %v90, %v102
    %vm117 = vcmask 15360
    %v118 = vsel %vm117, %v116, %v114
    %v119 = vld [vmem:[#allocation7] sm:$0x3]
    %v120 = vadd.f32 %v119, %v118
    %vm121 = vcmask 17408
    %122 = vst.msk [vmem:[#allocation7] sm:$0x3] %vm121, %v120
    // Predicated region
    $region22: #{tpu_custom_call.1} parent=1 // pred_check
      _
    $region23: #{tpu_custom_call.1} parent=1 // pred_check_branch
      %124 = sbr.rel (0) target = $region25
    $region24: #{tpu_custom_call.1} parent=1 // pred_region
      %126 = vsyncadd [#allocation4], 0
      %s128 = sshll.u32 [#allocation7], 4
      %s129 = int_to_ptr.vmem [resolvable:$true] %s128
      %s130 = sshll.u32 %s2, 4
      %s131 = int_to_ptr.hbm [resolvable:$true] %s130
      %133 = dma.vmem_to_hbm [thread:$0]  %s129, 32, %s131, [#allocation4]
    $region25: #{tpu_custom_call.1} parent=1 // pred_fallthru
      _
    // Predicated region
    $region26: #{tpu_custom_call.1} parent=1 // pred_check
      _
    $region27: #{tpu_custom_call.1} parent=1 // pred_check_branch
      %135 = sbr.rel (0) target = $region29
    $region28: #{tpu_custom_call.1} parent=1 // pred_region
      %137 = dma.done [#allocation4], 32
    $region29: #{tpu_custom_call.1} parent=1 // pred_fallthru
      _
    %138 = vsyncpa [#allocation3], 1
    %139 = vsyncpa [#allocation6], 1
    %140 = vsyncpa [#allocation4], 1

</llo_original>
